<compile_context>
chip_gen: v6e
topology: v6e:2x2x1
jax: 0.10.0
libtpu: 0.0.40
codegen_flags: <defaults>
</compile_context>

<pallas_src>
import math

import jax
import jax.numpy as jnp
from jax import lax
from jax.experimental import pallas as pl
from jax.experimental.pallas import tpu as pltpu


def _mixtral_mlp_kernel(x_ref, w13_ref, w2t_ref, o_ref, acc_ref):
    """One (token-tile i, ffn-tile j) grid step.

    x_ref  : (TM, dim)    token tile (resident across j)
    w13_ref: (2*TF, dim)  [W1_j ; W3_j] tile, PyTorch (out, in) layout
    w2t_ref: (TF, dim)    W2^T tile (pre-transposed once in the wrapper)
    o_ref  : (TM, dim)    output tile (resident across j, written at last j)
    acc_ref: (TM, dim)    f32 accumulator scratch
    """
    j = pl.program_id(1)
    tf = w13_ref.shape[0] // 2

    x = x_ref[...]                         # compute dtype (bf16 by default)

    # Gate + up projection in a single MXU pass:
    #   (TM, dim) . (2*TF, dim)^T -> (TM, 2*TF), f32 accumulation.
    # Contraction on the last dims lowers to a transposed MXU weight push
    # (same pattern as the reference flash-attention kernel); verified via
    # pl.lower_as_mlir that no explicit vxpose of the weight tile is emitted.
    dn_t = (((1,), (1,)), ((), ()))
    gu = lax.dot_general(x, w13_ref[...], dn_t,
                         preferred_element_type=jnp.float32)
    g = gu[:, :tf]
    u = gu[:, tf:]

    # SiLU(g) * u in f32 (sigmoid on the EUP slot, muls on the VPU).
    h = (g * jax.nn.sigmoid(g)) * u
    h = h.astype(x.dtype)                  # back to MXU dtype for the down-proj

    # Down projection, canonical contraction: (TM, TF) . (TF, dim) -> (TM, dim).
    dn = (((1,), (0,)), ((), ()))
    y = lax.dot_general(h, w2t_ref[...], dn,
                        preferred_element_type=jnp.float32)

    @pl.when(j == 0)
    def _():
        acc_ref[...] = y                   # first partial: no zero-fill + reload

    @pl.when(j > 0)
    def _():
        acc_ref[...] += y

    @pl.when(j == pl.num_programs(1) - 1)
    def _():
        o_ref[...] = acc_ref[...].astype(o_ref.dtype)


def _round_up(x, m):
    return ((x + m - 1) // m) * m


def mixtral_block_sparse_top2_mlp(hidden_states, w1, w2, w3, *,
                                  tm=None, tf=None, compute_dtype=None):
    """hidden_states: (..., dim). w1, w3: (ffn_dim, dim); w2: (dim, ffn_dim) —
    PyTorch nn.Linear (out_features, in_features) layout, no bias.

    compute_dtype: dtype fed to the MXU. Defaults to bfloat16 (standard
    Mixtral practice; f32 inputs are down-cast once in the wrapper while the
    SiLU path and the accumulator stay f32). Pass jnp.float32 for the exact
    f32 path.
    """
    orig_shape = hidden_states.shape
    out_dtype = hidden_states.dtype
    dim = orig_shape[-1]
    ffn_dim = w1.shape[0]

    x2d = hidden_states.reshape(-1, dim)
    T = x2d.shape[0]
    if T == 0:
        return jnp.zeros(orig_shape, out_dtype)

    if compute_dtype is None:
        compute_dtype = jnp.bfloat16
    c_isz = jnp.dtype(compute_dtype).itemsize
    o_isz = jnp.dtype(out_dtype).itemsize

    # ---- generation-aware tile selection ------------------------------------
    try:
        vmem_cap = int(getattr(pltpu.get_tpu_info(), "vmem_capacity_bytes",
                               64 * 1024 * 1024))
    except Exception:
        vmem_cap = 64 * 1024 * 1024                    # conservative (v7x-sized)
    big_vmem = vmem_cap >= 96 * 1024 * 1024            # v5e / v6e (128 MiB)

    auto_tm = tm is None
    if tm is None:
        # Weights are re-streamed from HBM once per token tile, so effective
        # arithmetic intensity ~ TM FLOP/byte. TM=1024 clears the v6e roofline
        # crossover (~650), TM=512 clears v7x (~310) / v5e (~250) while still
        # fitting the 64 MiB VMEM part.
        tm = 1024 if big_vmem else 512
    if tf is None:
        tf = 512

    # ffn tiling: full-extent block when small, otherwise a 128-aligned tile.
    if ffn_dim <= tf:
        TF = ffn_dim
        ffn_tiled = False
    else:
        TF = tf
        ffn_tiled = True

    TM = min(tm, _round_up(T, 8))
    if auto_tm and not big_vmem:
        # 2-TensorCore parts (v7x): keep >= 2 token tiles on the "parallel"
        # axis when there are enough tokens for each tile to stay near the
        # roofline crossover, so both cores get work.
        half = _round_up(-(-T // 2), 8)
        if half >= 256:
            TM = min(TM, half)

    def _vmem_est(tm_, tf_):
        return (2 * tm_ * dim * c_isz          # x tile, double-buffered
                + 2 * tm_ * dim * o_isz        # out tile, double-buffered
                + tm_ * dim * 4                # f32 accumulator scratch
                + 2 * 3 * tf_ * dim * c_isz    # [W1;W3] (2*TF) + W2^T (TF), x2 bufs
                + 3 * tm_ * tf_ * 4)           # gu / h f32 temporaries

    for _ in range(8):                         # safety shrink if over budget
        if _vmem_est(TM, TF) <= 0.75 * vmem_cap:
            break
        if ffn_tiled and TF > 256 and TF % 256 == 0:
            TF //= 2
        elif TM > 256:
            TM = max(8, _round_up(TM // 2, 8))
        else:
            break

    # ---- padding --------------------------------------------------------------
    T_pad = _round_up(T, TM)
    if T_pad != T:
        x2d = jnp.pad(x2d, ((0, T_pad - T), (0, 0)))

    w2t = jnp.transpose(w2)                    # (ffn, dim): one-time, weights are static
    F_pad = _round_up(ffn_dim, TF) if ffn_tiled else ffn_dim
    if F_pad != ffn_dim:
        pad_f = F_pad - ffn_dim
        w1 = jnp.pad(w1, ((0, pad_f), (0, 0)))
        w3 = jnp.pad(w3, ((0, pad_f), (0, 0)))
        w2t = jnp.pad(w2t, ((0, pad_f), (0, 0)))

    # Stack W1 / W3 per ffn tile -> one (2*TF, dim) block per grid step.
    n_f = F_pad // TF
    w13 = jnp.concatenate(
        [w1.reshape(n_f, TF, dim), w3.reshape(n_f, TF, dim)], axis=1
    ).reshape(2 * F_pad, dim)

    x2d = x2d.astype(compute_dtype)
    w13 = w13.astype(compute_dtype)
    w2t = w2t.astype(compute_dtype)

    grid = (T_pad // TM, F_pad // TF)

    vmem_limit = int(min(max(int(_vmem_est(TM, TF) * 1.3), 32 * 1024 * 1024),
                         int(vmem_cap * 0.85)))

    n_token_tiles = grid[0]
    cost = pl.CostEstimate(
        flops=int(6 * T_pad * dim * F_pad),                 # 3 matmuls, 2 flops/MAC
        transcendentals=int(T_pad * F_pad),                 # sigmoid
        bytes_accessed=int(T_pad * dim * (c_isz + o_isz)    # x read + out write
                           + n_token_tiles * 3 * F_pad * dim * c_isz),  # weights re-streamed per token tile
    )

    # TODO(synk): on 128 MiB-VMEM parts, if weight DMA is still exposed at
    # token-tile transitions, bump the weight BlockSpecs to
    # pipeline_mode=pl.Buffered(3) (not affordable on v7x's 64 MiB).
    out = pl.pallas_call(
        _mixtral_mlp_kernel,
        out_shape=jax.ShapeDtypeStruct((T_pad, dim), out_dtype),
        grid_spec=pltpu.PrefetchScalarGridSpec(
            num_scalar_prefetch=0,
            grid=grid,
            in_specs=[
                pl.BlockSpec((TM, dim), lambda i, j: (i, 0)),      # x tile (resident over j)
                pl.BlockSpec((2 * TF, dim), lambda i, j: (j, 0)),  # [W1;W3] tile (contiguous DMA)
                pl.BlockSpec((TF, dim), lambda i, j: (j, 0)),      # W2^T tile (contiguous DMA)
            ],
            out_specs=pl.BlockSpec((TM, dim), lambda i, j: (i, 0)),
            scratch_shapes=[pltpu.VMEM((TM, dim), jnp.float32)],
        ),
        compiler_params=pltpu.CompilerParams(
            dimension_semantics=("parallel", "arbitrary"),
            vmem_limit_bytes=vmem_limit,
        ),
        cost_estimate=cost,
    )(x2d, w13, w2t)

    if T_pad != T:
        out = out[:T]
    return out.reshape(orig_shape)


def _reference(hidden_states, w1, w2, w3, compute_dtype=None):
    """Pure-JAX reference, optionally rounding MXU operands to compute_dtype."""
    cd = compute_dtype if compute_dtype is not None else hidden_states.dtype
    f32 = jnp.float32
    x = hidden_states.astype(cd).astype(f32)
    w1f = w1.astype(cd).astype(f32)
    w2f = w2.astype(cd).astype(f32)
    w3f = w3.astype(cd).astype(f32)
    g = jnp.dot(x, w1f.T, precision="highest")
    u = jnp.dot(x, w3f.T, precision="highest")
    h = (g * jax.nn.sigmoid(g)) * u
    h = h.astype(cd).astype(f32)
    y = jnp.dot(h, w2f.T, precision="highest")
    return y.astype(hidden_states.dtype)


if __name__ == "__main__":
    # Case 1: module-consistent toy shapes: batch=2, seq=8, dim=32 -> ffn=ceil(32*3.5)=112.
    # Exact f32 MXU path; tolerance covers MXU-vs-XLA accumulation-order differences.
    batch, seq, dim = 2, 8, 32
    ffn_dim = math.ceil(dim * 3.5)

    key = jax.random.PRNGKey(0)
    kx, k1, k2, k3 = jax.random.split(key, 4)
    hidden_states = jax.random.normal(kx, (batch, seq, dim), dtype=jnp.float32)
    b1 = 1.0 / math.sqrt(dim)
    b2 = 1.0 / math.sqrt(ffn_dim)
    w1 = jax.random.uniform(k1, (ffn_dim, dim), jnp.float32, -b1, b1)
    w2 = jax.random.uniform(k2, (dim, ffn_dim), jnp.float32, -b2, b2)
    w3 = jax.random.uniform(k3, (ffn_dim, dim), jnp.float32, -b1, b1)

    y1 = mixtral_block_sparse_top2_mlp(hidden_states, w1, w2, w3,
                                       compute_dtype=jnp.float32)
    jax.block_until_ready(y1)
    y1_ref = _reference(hidden_states, w1, w2, w3, jnp.float32)
    assert y1.shape == hidden_states.shape
    assert jnp.allclose(y1, y1_ref, atol=1e-2, rtol=1e-2), "case 1 mismatch vs reference"

    # Case 2: tiled + padded accumulation path with small explicit tiles
    # (T=20 padded to 24 @ TM=8; ffn=448 padded to 512 @ TF=128) and the
    # default bf16 MXU-operand path (f32 accumulation, f32 output dtype).
    dim2 = 128
    ffn2 = math.ceil(dim2 * 3.5)
    kx2, k12, k22, k32 = jax.random.split(jax.random.PRNGKey(1), 4)
    hs2 = jax.random.normal(kx2, (2, 10, dim2), dtype=jnp.float32)
    c1 = 1.0 / math.sqrt(dim2)
    c2 = 1.0 / math.sqrt(ffn2)
    w1b = jax.random.uniform(k12, (ffn2, dim2), jnp.float32, -c1, c1)
    w2b = jax.random.uniform(k22, (dim2, ffn2), jnp.float32, -c2, c2)
    w3b = jax.random.uniform(k32, (ffn2, dim2), jnp.float32, -c1, c1)

    y2 = mixtral_block_sparse_top2_mlp(hs2, w1b, w2b, w3b, tm=8, tf=128)
    jax.block_until_ready(y2)
    y2_ref = _reference(hs2, w1b, w2b, w3b, jnp.bfloat16)
    assert y2.shape == hs2.shape
    assert jnp.allclose(y2, y2_ref, atol=3e-2, rtol=3e-2), "case 2 mismatch vs reference"

    print("KERNEL_OK")
</pallas_src>

<mosaic_0001>
module attributes {stable_mosaic.version = 11 : i64} {
  func.func @_mixtral_mlp_kernel(%arg0: i32, %arg1: i32, %arg2: memref<16x32xf32, #tpu.memory_space<vmem>>, %arg3: memref<224x32xf32, #tpu.memory_space<vmem>>, %arg4: memref<112x32xf32, #tpu.memory_space<vmem>>, %arg5: memref<16x32xf32, #tpu.memory_space<vmem>>, %arg6: memref<16x32xf32, #tpu.memory_space<vmem>>) attributes {dimension_semantics = [#tpu.dimension_semantics<parallel>, #tpu.dimension_semantics<arbitrary>], iteration_bounds = array<i64: 1, 1>, scalar_prefetch = 0 : i64, scratch_operands = 1 : i64, tpu.core_type = #tpu.core_type<tc>, window_params = [{transform_indices = @transform_0, window_bounds = array<i64: 16, 32>}, {transform_indices = @transform_1, window_bounds = array<i64: 224, 32>}, {transform_indices = @transform_2, window_bounds = array<i64: 112, 32>}, {transform_indices = @transform_3, window_bounds = array<i64: 16, 32>}]} {
    %c0 = arith.constant 0 : index
    %c0_0 = arith.constant 0 : index
    %0 = vector.load %arg2[%c0, %c0_0] : memref<16x32xf32, #tpu.memory_space<vmem>>, vector<16x32xf32>
    %c0_1 = arith.constant 0 : index
    %c0_2 = arith.constant 0 : index
    %1 = vector.load %arg3[%c0_1, %c0_2] : memref<224x32xf32, #tpu.memory_space<vmem>>, vector<224x32xf32>
    %cst = arith.constant dense<0.000000e+00> : vector<16x224xf32>
    %2 = tpu.matmul %0, %1, %cst {dimension_numbers = #tpu.dot_dimension_numbers<[1], [1], [0], [0], [0, 0, 1, 0], [], []>} : vector<16x32xf32>, vector<224x32xf32>, vector<16x224xf32> -> vector<16x224xf32>
    %3 = vector.extract_strided_slice %2 {offsets = [0, 0], sizes = [16, 112], strides = [1, 1]} : vector<16x224xf32> to vector<16x112xf32>
    %4 = vector.extract_strided_slice %2 {offsets = [0, 112], sizes = [16, 112], strides = [1, 1]} : vector<16x224xf32> to vector<16x112xf32>
    %5 = arith.negf %3 : vector<16x112xf32>
    %6 = math.exp %5 : vector<16x112xf32>
    %cst_3 = arith.constant 1.000000e+00 : f32
    %7 = vector.broadcast %cst_3 : f32 to vector<16x112xf32>
    %8 = arith.addf %7, %6 : vector<16x112xf32>
    %9 = arith.divf %7, %8 : vector<16x112xf32>
    %10 = arith.mulf %3, %9 : vector<16x112xf32>
    %11 = arith.mulf %10, %4 : vector<16x112xf32>
    %c0_4 = arith.constant 0 : index
    %c0_5 = arith.constant 0 : index
    %12 = vector.load %arg4[%c0_4, %c0_5] : memref<112x32xf32, #tpu.memory_space<vmem>>, vector<112x32xf32>
    %cst_6 = arith.constant dense<0.000000e+00> : vector<16x32xf32>
    %13 = tpu.matmul %11, %12, %cst_6 {dimension_numbers = #tpu.dot_dimension_numbers<[1], [0], [0], [1], [0, 0, 1, 1], [], []>} : vector<16x112xf32>, vector<112x32xf32>, vector<16x32xf32> -> vector<16x32xf32>
    %c0_i32 = arith.constant 0 : i32
    %14 = arith.cmpi eq, %arg1, %c0_i32 : i32
    %15 = arith.extui %14 : i1 to i32
    %c0_i32_7 = arith.constant 0 : i32
    %16 = arith.cmpi ne, %15, %c0_i32_7 : i32
    scf.if %16 {
      %c0_12 = arith.constant 0 : index
      %c0_13 = arith.constant 0 : index
      %23 = vector.load %arg6[%c0_12, %c0_13] : memref<16x32xf32, #tpu.memory_space<vmem>>, vector<16x32xf32>
      tpu.vector_store %arg6[%c0_12, %c0_13], %13 {strides = array<i32>} : memref<16x32xf32, #tpu.memory_space<vmem>>, vector<16x32xf32>,
    } else {
    }
    %c0_i32_8 = arith.constant 0 : i32
    %17 = arith.cmpi sgt, %arg1, %c0_i32_8 : i32
    %18 = arith.extui %17 : i1 to i32
    %c0_i32_9 = arith.constant 0 : i32
    %19 = arith.cmpi ne, %18, %c0_i32_9 : i32
    scf.if %19 {
      %c0_12 = arith.constant 0 : index
      %c0_13 = arith.constant 0 : index
      %23 = vector.load %arg6[%c0_12, %c0_13] : memref<16x32xf32, #tpu.memory_space<vmem>>, vector<16x32xf32>
      %24 = arith.addf %23, %13 : vector<16x32xf32>
      %c0_14 = arith.constant 0 : index
      %c0_15 = arith.constant 0 : index
      %25 = vector.load %arg6[%c0_14, %c0_15] : memref<16x32xf32, #tpu.memory_space<vmem>>, vector<16x32xf32>
      tpu.vector_store %arg6[%c0_14, %c0_15], %24 {strides = array<i32>} : memref<16x32xf32, #tpu.memory_space<vmem>>, vector<16x32xf32>,
    } else {
    }
    %c0_i32_10 = arith.constant 0 : i32
    %20 = arith.cmpi eq, %arg1, %c0_i32_10 : i32
    %21 = arith.extui %20 : i1 to i32
    %c0_i32_11 = arith.constant 0 : i32
    %22 = arith.cmpi ne, %21, %c0_i32_11 : i32
    scf.if %22 {
      %c0_12 = arith.constant 0 : index
      %c0_13 = arith.constant 0 : index
      %23 = vector.load %arg6[%c0_12, %c0_13] : memref<16x32xf32, #tpu.memory_space<vmem>>, vector<16x32xf32>
      %c0_14 = arith.constant 0 : index
      %c0_15 = arith.constant 0 : index
      %24 = vector.load %arg5[%c0_14, %c0_15] : memref<16x32xf32, #tpu.memory_space<vmem>>, vector<16x32xf32>
      tpu.vector_store %arg5[%c0_14, %c0_15], %23 {strides = array<i32>} : memref<16x32xf32, #tpu.memory_space<vmem>>, vector<16x32xf32>,
    } else {
    }
    return
  }
  func.func @transform_0(%arg0: i32, %arg1: i32) -> (i32, i32) {
    %c0_i32 = arith.constant 0 : i32
    %c0_i32_0 = arith.constant 0 : i32
    return %arg0, %c0_i32 : i32, i32
  }
  func.func @transform_1(%arg0: i32, %arg1: i32) -> (i32, i32) {
    %c0_i32 = arith.constant 0 : i32
    %c0_i32_0 = arith.constant 0 : i32
    return %arg1, %c0_i32 : i32, i32
  }
  func.func @transform_2(%arg0: i32, %arg1: i32) -> (i32, i32) {
    %c0_i32 = arith.constant 0 : i32
    %c0_i32_0 = arith.constant 0 : i32
    return %arg1, %c0_i32 : i32, i32
  }
  func.func @transform_3(%arg0: i32, %arg1: i32) -> (i32, i32) {
    %c0_i32 = arith.constant 0 : i32
    %c0_i32_0 = arith.constant 0 : i32
    return %arg0, %c0_i32 : i32, i32
  }
}

</mosaic_0001>

<llo_original>
// kernel: tpu_custom_call.1
$region0: #{tpu_custom_call.1}
  #allocation0 [shape = 'u32[]', space=smem, size = 0x4, offset = 0x4, fixed_abs, tag = 'smem constant byte address 0x4 - core index']
  #allocation1 [shape = 'u32[144,128]{1,0:T(1,128)}', space=vmem, size = 0x12000, scoped, tag = 'internal scratch']
  #allocation2 [shape = 'f32[16,32]{1,0:T(8,128)}', space=vmem, size = 0x2000, scoped, tag = 'scratch operand']
  %s0 = inlined_call_operand.vmem [shape: f32[16,32], index: 0, kind: input, shape index: {}]
  %s1 = inlined_call_operand.vmem [shape: f32[224,32], index: 1, kind: input, shape index: {}]
  %s2 = inlined_call_operand.vmem [shape: f32[112,32], index: 2, kind: input, shape index: {}]
  %s3 = inlined_call_operand.hbm [shape: f32[16,32], index: 3, kind: output, shape index: {}]
  %s4 = sld [smem:[#allocation0]]
  $region34: #{tpu_custom_call.1} parent=0
    _
  %s6 = ssub.s32 1, %s4
  %s7 = scalar_select 0, %s6, %s4
  $region1: #{tpu_custom_call.1} parent=0
    #allocation3 [shape = 'u8[8192]{0}', space=vmem, size = 0x2000, scoped, tag = 'output window, operand 0, single buffered']
    #allocation4 [shape = 's32[1]{0}', space=sflag, size = 0x4, scoped, tag = 'scoped memory for tpu_custom_call.1']
    %8 = vsyncpa [#allocation4], 0
    // Predicated region
    $region2: #{tpu_custom_call.1} parent=1 // pred_check
      _
    $region3: #{tpu_custom_call.1} parent=1 // pred_check_branch
      %10 = sbr.rel (0) target = $region5
    $region4: #{tpu_custom_call.1} parent=1 // pred_region
      _
    $region5: #{tpu_custom_call.1} parent=1 // pred_fallthru
      _
    // Predicated region
    $region6: #{tpu_custom_call.1} parent=1 // pred_check
      _
    $region7: #{tpu_custom_call.1} parent=1 // pred_check_branch
      %12 = sbr.rel (0) target = $region9
    $region8: #{tpu_custom_call.1} parent=1 // pred_region
      _
    $region9: #{tpu_custom_call.1} parent=1 // pred_fallthru
      _
    // Predicated region
    $region10: #{tpu_custom_call.1} parent=1 // pred_check
      _
    $region11: #{tpu_custom_call.1} parent=1 // pred_check_branch
      %14 = sbr.rel (0) target = $region13
    $region12: #{tpu_custom_call.1} parent=1 // pred_region
      _
    $region13: #{tpu_custom_call.1} parent=1 // pred_fallthru
      _
    %v15 = vld [vmem:[%s0] sm:$0xff]
    %v16 = vld [vmem:[%s0 + $0x8] sm:$0xff]
    %v17 = vld [vmem:[%s1] sm:$0xff]
    %v18 = vld [vmem:[%s1 + $0x8] sm:$0xff]
    %v19 = vld [vmem:[%s1 + $0x10] sm:$0xff]
    %v20 = vld [vmem:[%s1 + $0x18] sm:$0xff]
    %v21 = vld [vmem:[%s1 + $0x20] sm:$0xff]
    %v22 = vld [vmem:[%s1 + $0x28] sm:$0xff]
    %v23 = vld [vmem:[%s1 + $0x30] sm:$0xff]
    %v24 = vld [vmem:[%s1 + $0x38] sm:$0xff]
    %v25 = vld [vmem:[%s1 + $0x40] sm:$0xff]
    %v26 = vld [vmem:[%s1 + $0x48] sm:$0xff]
    %v27 = vld [vmem:[%s1 + $0x50] sm:$0xff]
    %v28 = vld [vmem:[%s1 + $0x58] sm:$0xff]
    %v29 = vld [vmem:[%s1 + $0x60] sm:$0xff]
    %v30 = vld [vmem:[%s1 + $0x68] sm:$0xff]
    %v31 = vld [vmem:[%s1 + $0x70] sm:$0xff]
    %v32 = vld [vmem:[%s1 + $0x78] sm:$0xff]
    %v33 = vld [vmem:[%s1 + $0x80] sm:$0xff]
    %v34 = vld [vmem:[%s1 + $0x88] sm:$0xff]
    %v35 = vld [vmem:[%s1 + $0x90] sm:$0xff]
    %v36 = vld [vmem:[%s1 + $0x98] sm:$0xff]
    %v37 = vld [vmem:[%s1 + $0xa0] sm:$0xff]
    %v38 = vld [vmem:[%s1 + $0xa8] sm:$0xff]
    %v39 = vld [vmem:[%s1 + $0xb0] sm:$0xff]
    %v40 = vld [vmem:[%s1 + $0xb8] sm:$0xff]
    %v41 = vld [vmem:[%s1 + $0xc0] sm:$0xff]
    %v42 = vld [vmem:[%s1 + $0xc8] sm:$0xff]
    %v43 = vld [vmem:[%s1 + $0xd0] sm:$0xff]
    %v44 = vld [vmem:[%s1 + $0xd8] sm:$0xff]
    %vm45 = vcmask 261120
    %v47 = vsel %vm45, %v15, 0
    %v50 = vsel %vm45, %v16, 0
    %v53 = vsel %vm45, %v17, 0
    %v56 = vsel %vm45, %v18, 0
    %v59 = vsel %vm45, %v19, 0
    %v62 = vsel %vm45, %v20, 0
    %v65 = vsel %vm45, %v21, 0
    %v68 = vsel %vm45, %v22, 0
    %v71 = vsel %vm45, %v23, 0
    %v74 = vsel %vm45, %v24, 0
    %v77 = vsel %vm45, %v25, 0
    %v80 = vsel %vm45, %v26, 0
    %v83 = vsel %vm45, %v27, 0
    %v86 = vsel %vm45, %v28, 0
    %v89 = vsel %vm45, %v29, 0
    %v92 = vsel %vm45, %v30, 0
    %v95 = vsel %vm45, %v31, 0
    %v98 = vsel %vm45, %v32, 0
    %v101 = vsel %vm45, %v33, 0
    %v104 = vsel %vm45, %v34, 0
    %v107 = vsel %vm45, %v35, 0
    %v110 = vsel %vm45, %v36, 0
    %v113 = vsel %vm45, %v37, 0
    %v116 = vsel %vm45, %v38, 0
    %v119 = vsel %vm45, %v39, 0
    %v122 = vsel %vm45, %v40, 0
    %v125 = vsel %vm45, %v41, 0
    %v128 = vsel %vm45, %v42, 0
    %v131 = vsel %vm45, %v43, 0
    %v134 = vsel %vm45, %v44, 0
    %136 = vmatprep.subr.mxu0 0.0
    %137 = vmatpush1.xpose.msra.mxu0 %v98
    %138 = vmatprep.subr.mxu0 0.0
    %139 = vmatpush1.xpose.msra.mxu0 %v95
    %140 = vmatprep.subr.mxu0 0.0
    %141 = vmatpush1.xpose.msra.mxu0 %v92
    %142 = vmatprep.subr.mxu0 0.0
    %143 = vmatpush1.xpose.msra.mxu0 %v89
    %144 = vmatprep.subr.mxu0 0.0
    %145 = vmatpush1.xpose.msra.mxu0 %v86
    %146 = vmatprep.subr.mxu0 0.0
    %147 = vmatpush1.xpose.msra.mxu0 %v83
    %148 = vmatprep.subr.mxu0 0.0
    %149 = vmatpush1.xpose.msra.mxu0 %v80
    %150 = vmatprep.subr.mxu0 0.0
    %151 = vmatpush1.xpose.msra.mxu0 %v77
    %152 = vmatprep.subr.mxu0 0.0
    %153 = vmatpush1.xpose.msra.mxu0 %v74
    %154 = vmatprep.subr.mxu0 0.0
    %155 = vmatpush1.xpose.msra.mxu0 %v71
    %156 = vmatprep.subr.mxu0 0.0
    %157 = vmatpush1.xpose.msra.mxu0 %v68
    %158 = vmatprep.subr.mxu0 0.0
    %159 = vmatpush1.xpose.msra.mxu0 %v65
    %160 = vmatprep.subr.mxu0 0.0
    %161 = vmatpush1.xpose.msra.mxu0 %v62
    %162 = vmatprep.subr.mxu0 0.0
    %163 = vmatpush1.xpose.msra.mxu0 %v59
    %164 = vmatprep.subr.mxu0 0.0
    %165 = vmatpush1.xpose.msra.mxu0 %v56
    %166 = vmatprep.subr.mxu0 0.0
    %167 = vmatpush1.xpose.msra.mxu0 %v53
    %168 = vmatprep.subr.mxu0 0.0
    %169 = vmatpush2.xpose.msra.mxu0 0.0
    %170 = vmatprep.subr.mxu0 0.0
    %171 = vmatpush2.xpose.msra.mxu0 0.0
    %172 = vmatprep.subr.mxu0 0.0
    %173 = vmatpush2.xpose.msra.mxu0 0.0
    %174 = vmatprep.subr.mxu0 0.0
    %175 = vmatpush2.xpose.msra.mxu0 0.0
    %176 = vmatprep.subr.mxu0 0.0
    %177 = vmatpush2.xpose.msra.mxu0 %v134
    %178 = vmatprep.subr.mxu0 0.0
    %179 = vmatpush2.xpose.msra.mxu0 %v131
    %180 = vmatprep.subr.mxu0 0.0
    %181 = vmatpush2.xpose.msra.mxu0 %v128
    %182 = vmatprep.subr.mxu0 0.0
    %183 = vmatpush2.xpose.msra.mxu0 %v125
    %184 = vmatprep.subr.mxu0 0.0
    %185 = vmatpush2.xpose.msra.mxu0 %v122
    %186 = vmatprep.subr.mxu0 0.0
    %187 = vmatpush2.xpose.msra.mxu0 %v119
    %188 = vmatprep.subr.mxu0 0.0
    %189 = vmatpush2.xpose.msra.mxu0 %v116
    %190 = vmatprep.subr.mxu0 0.0
    %191 = vmatpush2.xpose.msra.mxu0 %v113
    %192 = vmatprep.subr.mxu0 0.0
    %193 = vmatpush2.xpose.msra.mxu0 %v110
    %194 = vmatprep.subr.mxu0 0.0
    %195 = vmatpush2.xpose.msra.mxu0 %v107
    %196 = vmatprep.subr.mxu0 0.0
    %197 = vmatpush2.xpose.msra.mxu0 %v104
    %198 = vmatprep.subr.mxu0 0.0
    %199 = vmatpush2.xpose.msra.mxu0 %v101
    %200 = vmatprep.mubr.f32.mxu0 0.0
    %201 = vmatmul.mubr.f32.gmra.mxu0 %v47
    %v202 = vpop.f32.mrf.mxu0
    %v203 = vadd.f32 0.0, %v202
    %v204 = vpop.f32.mrf.mxu0
    %v205 = vadd.f32 0.0, %v204
    %206 = vmatprep.mubr.f32.mxu0 0.0
    %207 = vmatmul.mubr.f32.gmra.mxu0 %v50
    %v208 = vpop.f32.mrf.mxu0
    %v209 = vadd.f32 0.0, %v208
    %v210 = vpop.f32.mrf.mxu0
    %v211 = vadd.f32 0.0, %v210
    %212 = vdwg.mxu0
    %v213 = vxor.u32 %v203, 2147483648
    %v214 = vxor.u32 %v209, 2147483648
    %v215 = vmul.f32 %v213, 1.442695
    %v216 = vpow.pop %v215
    %v217 = vmul.f32 %v214, 1.442695
    %v218 = vpow.pop %v217
    %v219 = vadd.f32 %v216, 1.0
    %v220 = vadd.f32 %v218, 1.0
    %v221 = vrcp.pop %v219
    %v222 = vmul.f32 1.0, %v221
    %v223 = vrcp.pop %v220
    %v224 = vmul.f32 1.0, %v223
    %v225 = vmul.f32 %v203, %v222
    %v226 = vmul.f32 %v209, %v224
    %231 = vrot.lane.b32.xlu0 %v203, 16
    %v232 = vpop.permute.xlu0 %231
    %233 = vrot.lane.b32.xlu0 %v205, 16
    %v234 = vpop.permute.xlu0 %233
    %235 = vrot.lane.b32.xlu0 %v209, 16
    %v236 = vpop.permute.xlu0 %235
    %237 = vrot.lane.b32.xlu0 %v211, 16
    %v238 = vpop.permute.xlu0 %237
    %vm239 = vcmask 130048
    %v240 = vsel %vm239, %v232, %v234
    %v241 = vsel %vm239, %v236, %v238
    %v244 = vmul.f32 %v225, %v240
    %v245 = vmul.f32 %v226, %v241
    %v246 = vld [vmem:[%s2] sm:$0xff]
    %v247 = vld [vmem:[%s2 + $0x8] sm:$0xff]
    %v248 = vld [vmem:[%s2 + $0x10] sm:$0xff]
    %v249 = vld [vmem:[%s2 + $0x18] sm:$0xff]
    %v250 = vld [vmem:[%s2 + $0x20] sm:$0xff]
    %v251 = vld [vmem:[%s2 + $0x28] sm:$0xff]
    %v252 = vld [vmem:[%s2 + $0x30] sm:$0xff]
    %v253 = vld [vmem:[%s2 + $0x38] sm:$0xff]
    %v254 = vld [vmem:[%s2 + $0x40] sm:$0xff]
    %v255 = vld [vmem:[%s2 + $0x48] sm:$0xff]
    %v256 = vld [vmem:[%s2 + $0x50] sm:$0xff]
    %v257 = vld [vmem:[%s2 + $0x58] sm:$0xff]
    %v258 = vld [vmem:[%s2 + $0x60] sm:$0xff]
    %v259 = vld [vmem:[%s2 + $0x68] sm:$0xff]
    %vm260 = vcmask 916480
    %v262 = vsel %vm260, %v244, 0
    %v265 = vsel %vm260, %v245, 0
    %267 = vmatprep.subr.mxu0 0.0
    %268 = vmatpush1.msra.mxu0 0.0
    %269 = vmatprep.subr.mxu0 0.0
    %270 = vmatpush1.msra.mxu0 0.0
    %271 = vmatprep.subr.mxu0 0.0
    %272 = vmatpush1.msra.mxu0 %v259
    %273 = vmatprep.subr.mxu0 0.0
    %274 = vmatpush1.msra.mxu0 %v258
    %275 = vmatprep.subr.mxu0 0.0
    %276 = vmatpush1.msra.mxu0 %v257
    %277 = vmatprep.subr.mxu0 0.0
    %278 = vmatpush1.msra.mxu0 %v256
    %279 = vmatprep.subr.mxu0 0.0
    %280 = vmatpush1.msra.mxu0 %v255
    %281 = vmatprep.subr.mxu0 0.0
    %282 = vmatpush1.msra.mxu0 %v254
    %283 = vmatprep.subr.mxu0 0.0
    %284 = vmatpush1.msra.mxu0 %v253
    %285 = vmatprep.subr.mxu0 0.0
    %286 = vmatpush1.msra.mxu0 %v252
    %287 = vmatprep.subr.mxu0 0.0
    %288 = vmatpush1.msra.mxu0 %v251
    %289 = vmatprep.subr.mxu0 0.0
    %290 = vmatpush1.msra.mxu0 %v250
    %291 = vmatprep.subr.mxu0 0.0
    %292 = vmatpush1.msra.mxu0 %v249
    %293 = vmatprep.subr.mxu0 0.0
    %294 = vmatpush1.msra.mxu0 %v248
    %295 = vmatprep.subr.mxu0 0.0
    %296 = vmatpush1.msra.mxu0 %v247
    %297 = vmatprep.subr.mxu0 0.0
    %298 = vmatpush1.msra.mxu0 %v246
    %299 = vmatprep.subr.mxu0 0.0
    %300 = vmatpush2.msra.mxu0 0.0
    %301 = vmatprep.subr.mxu0 0.0
    %302 = vmatpush2.msra.mxu0 0.0
    %303 = vmatprep.subr.mxu0 0.0
    %304 = vmatpush2.msra.mxu0 0.0
    %305 = vmatprep.subr.mxu0 0.0
    %306 = vmatpush2.msra.mxu0 0.0
    %307 = vmatprep.subr.mxu0 0.0
    %308 = vmatpush2.msra.mxu0 0.0
    %309 = vmatprep.subr.mxu0 0.0
    %310 = vmatpush2.msra.mxu0 0.0
    %311 = vmatprep.subr.mxu0 0.0
    %312 = vmatpush2.msra.mxu0 0.0
    %313 = vmatprep.subr.mxu0 0.0
    %314 = vmatpush2.msra.mxu0 0.0
    %315 = vmatprep.subr.mxu0 0.0
    %316 = vmatpush2.msra.mxu0 0.0
    %317 = vmatprep.subr.mxu0 0.0
    %318 = vmatpush2.msra.mxu0 0.0
    %319 = vmatprep.subr.mxu0 0.0
    %320 = vmatpush2.msra.mxu0 0.0
    %321 = vmatprep.subr.mxu0 0.0
    %322 = vmatpush2.msra.mxu0 0.0
    %323 = vmatprep.subr.mxu0 0.0
    %324 = vmatpush2.msra.mxu0 0.0
    %325 = vmatprep.subr.mxu0 0.0
    %326 = vmatpush2.msra.mxu0 0.0
    %327 = vmatprep.subr.mxu0 0.0
    %328 = vmatpush2.msra.mxu0 0.0
    %329 = vmatprep.subr.mxu0 0.0
    %330 = vmatpush2.msra.mxu0 0.0
    %331 = vmatprep.mubr.f32.mxu0 0.0
    %332 = vmatmul.mubr.f32.gmra.mxu0 %v262
    %v333 = vpop.f32.mrf.mxu0
    %v334 = vadd.f32 0.0, %v333
    %v335 = vpop.f32.mrf.mxu0
    %336 = vmatprep.mubr.f32.mxu0 0.0
    %337 = vmatmul.mubr.f32.gmra.mxu0 %v265
    %v338 = vpop.f32.mrf.mxu0
    %v339 = vadd.f32 0.0, %v338
    %v340 = vpop.f32.mrf.mxu0
    %341 = vdwg.mxu0
    %p342 = scmp.eq.s32.totalorder 0, 0
    // Predicated region
    $region14: #{tpu_custom_call.1} parent=1 // pred_check
      %p343 = pneg %p342
    $region15: #{tpu_custom_call.1} parent=1 // pred_check_branch
      %345 = sbr.rel (%p343) target = $region17
    $region16: #{tpu_custom_call.1} parent=1 // pred_region
      %346 = vst.msk [vmem:[#allocation2] sm:$0xff] %vm45, %v334
      %347 = vst.msk [vmem:[#allocation2 + $0x8] sm:$0xff] %vm45, %v339
    $region17: #{tpu_custom_call.1} parent=1 // pred_fallthru
      _
    %p348 = scmp.gt.s32.totalorder 0, 0
    // Predicated region
    $region18: #{tpu_custom_call.1} parent=1 // pred_check
      %p349 = pneg %p348
    $region19: #{tpu_custom_call.1} parent=1 // pred_check_branch
      %351 = sbr.rel (%p349) target = $region21
    $region20: #{tpu_custom_call.1} parent=1 // pred_region
      %v352 = vld [vmem:[#allocation2] sm:$0xff]
      %v353 = vld [vmem:[#allocation2 + $0x8] sm:$0xff]
      %v354 = vadd.f32 %v352, %v334
      %v355 = vadd.f32 %v353, %v339
      %356 = vst.msk [vmem:[#allocation2] sm:$0xff] %vm45, %v354
      %357 = vst.msk [vmem:[#allocation2 + $0x8] sm:$0xff] %vm45, %v355
    $region21: #{tpu_custom_call.1} parent=1 // pred_fallthru
      _
    // Predicated region
    $region22: #{tpu_custom_call.1} parent=1 // pred_check
      %p358 = pneg %p342
    $region23: #{tpu_custom_call.1} parent=1 // pred_check_branch
      %360 = sbr.rel (%p358) target = $region25
    $region24: #{tpu_custom_call.1} parent=1 // pred_region
      %v361 = vld [vmem:[#allocation2] sm:$0xff]
      %v362 = vld [vmem:[#allocation2 + $0x8] sm:$0xff]
      %363 = vst.msk [vmem:[#allocation3] sm:$0xff] %vm45, %v361
      %364 = vst.msk [vmem:[#allocation3 + $0x8] sm:$0xff] %vm45, %v362
    $region25: #{tpu_custom_call.1} parent=1 // pred_fallthru
      _
    // Predicated region
    $region26: #{tpu_custom_call.1} parent=1 // pred_check
      _
    $region27: #{tpu_custom_call.1} parent=1 // pred_check_branch
      %366 = sbr.rel (0) target = $region29
    $region28: #{tpu_custom_call.1} parent=1 // pred_region
      %s368 = ssub.s32 256, 256
      %369 = vsyncadd [#allocation4], %s368
      %s370 = sshll.u32 [#allocation3], 4
      %s371 = int_to_ptr.vmem [resolvable:$true] %s370
      %376 = dma.vmem_to_hbm [thread:$0]  %s371, 256, %s3, [#allocation4], 128, 128, 8
    $region29: #{tpu_custom_call.1} parent=1 // pred_fallthru
      _
    // Predicated region
    $region30: #{tpu_custom_call.1} parent=1 // pred_check
      _
    $region31: #{tpu_custom_call.1} parent=1 // pred_check_branch
      %378 = sbr.rel (0) target = $region33
    $region32: #{tpu_custom_call.1} parent=1 // pred_region
      %379 = dma.done [#allocation4], 256
    $region33: #{tpu_custom_call.1} parent=1 // pred_fallthru
      _
    %380 = vsyncpa [#allocation4], 1

</llo_original>
